<compile_context>
chip_gen: v7x
topology: tpu7x:2x2x1
jax: 0.10.0
libtpu: 0.0.40
codegen_flags: <defaults>
</compile_context>

<pallas_src>
import functools

import jax
import jax.numpy as jnp
from jax.experimental import pallas as pl
from jax.experimental.pallas import tpu as pltpu

HIDDEN_PAD = 128   # hidden dim (10) zero-padded to one full lane width
_LANE = 128
_SUBLANE = 8


def _round_up(x, m):
    return ((x + m - 1) // m) * m


def _cdiv(a, b):
    return (a + b - 1) // b


def mlp_kernel(x_ref, w1_ref, b1_ref, w2_ref, b2_ref, ot_ref):
    """One batch tile of: out^T = W2_pad @ relu(x @ W1_pad + b1)^T + b2.

    x_ref : [tb, n_input]           streamed per grid step (double-buffered)
    w1_ref: [n_input, HIDDEN_PAD]   resident (constant index_map)
    b1_ref: [1, HIDDEN_PAD]         resident
    w2_ref: [n_output, HIDDEN_PAD]  resident (PyTorch orientation, hidden-padded)
    b2_ref: [n_output, 1]           resident
    ot_ref: [n_output, tb]          lane-dense transposed output tile
    """
    # In-kernel cast (no-op for f32) -- avoids a separate wrapper-side HBM pass.
    x = x_ref[...].astype(w1_ref.dtype)

    # First linear + bias (MXU, f32 accumulation); hidden is lane-dense (128).
    h = jnp.dot(x, w1_ref[...], preferred_element_type=jnp.float32) + b1_ref[...]
    h = jnp.maximum(h, 0.0)                       # ReLU on full-width lanes (VPU)

    # Second linear in transposed form: out^T = W2 @ h^T.  The batch tile lands
    # on the lane axis -> dense (unmasked) stores and tiny out VMEM buffers.
    # h^T is a cheap [tb,128]->[128,tb] XLU transpose (XLU slot is otherwise idle).
    out_t = jnp.dot(w2_ref[...], h.astype(w2_ref.dtype).T,
                    preferred_element_type=jnp.float32) + b2_ref[...]
    ot_ref[...] = out_t.astype(ot_ref.dtype)


def prepare_params(w1, b1, w2, b2, *, compute_dtype=jnp.float32):
    """One-time parameter prep (hoisted out of the per-call path).

    w1: [10, n_input], b1: [10], w2: [n_output, 10], b2: [n_output]
    Returns hidden-padded params:
      w1_in [n_input, 128], b1_row [1, 128], w2_t [n_output, 128], b2_col [n_output, 1]
    Zero padding is exact (padded hidden units are identically 0 after ReLU).
    """
    n_hidden, n_input = w1.shape
    n_output = w2.shape[0]
    w1_in = (jnp.zeros((n_input, HIDDEN_PAD), compute_dtype)
             .at[:, :n_hidden].set(jnp.asarray(w1, compute_dtype).T))
    b1_row = (jnp.zeros((1, HIDDEN_PAD), jnp.float32)
              .at[:, :n_hidden].set(jnp.asarray(b1, jnp.float32)[None, :]))
    w2_t = (jnp.zeros((n_output, HIDDEN_PAD), compute_dtype)
            .at[:, :n_hidden].set(jnp.asarray(w2, compute_dtype)))
    b2_col = jnp.asarray(b2, jnp.float32)[:, None]
    return w1_in, b1_row, w2_t, b2_col


@functools.partial(jax.jit, static_argnames=("tile_b",))
def net_forward_t(x, w1_in, b1_row, w2_t, b2_col, *, tile_b=8192):
    """Lane-dense fast path: x [B, n_input] -> out^T [n_output, B]."""
    B, n_input = x.shape
    hidden_pad = w1_in.shape[1]
    n_output = w2_t.shape[0]

    # ---- batch tiling -----------------------------------------------------
    B8 = _round_up(B, _SUBLANE)
    n_steps = _cdiv(B8, tile_b)
    # >=2 grid steps for mid/large batches so v7x's 2 TensorCores both work.
    if n_steps == 1 and B8 >= 4 * _LANE:
        n_steps = 2
    if n_steps > 1:
        # Tile must be a multiple of 128 (it is the lane dim of the out^T block).
        tb = _round_up(_cdiv(B8, n_steps), _LANE)
    else:
        tb = B8
    # Pad only to tb*n_steps (<= ~128*n_steps extra rows), never a full tile.
    B_pad = tb * n_steps
    if B_pad != B:
        x = jnp.pad(x, ((0, B_pad - B), (0, 0)))

    # ---- explicit VMEM budget (sized from actual buffers, + headroom) ------
    itemsize = jnp.dtype(x.dtype).itemsize
    vmem_bytes = (
        2 * tb * _LANE * itemsize            # x double-buffer (minor padded to 128 lanes)
        + 2 * tb * hidden_pad * 4            # h and h^T f32 transients
        + 2 * _SUBLANE * tb * 4              # out^T double-buffer (sublane-padded)
        + 4 * (n_input + n_output + 2) * hidden_pad * 4   # resident params
        + (4 << 20)                          # headroom for Mosaic internals
    )
    vmem_limit = int(min(max(vmem_bytes, 16 << 20), 64 << 20))

    cost = pl.CostEstimate(
        flops=2 * B_pad * hidden_pad * (n_input + n_output),
        transcendentals=0,
        bytes_accessed=B_pad * (n_input * itemsize + n_output * 4)
        + (n_input + n_output + 2) * hidden_pad * 4,
    )

    out_t = pl.pallas_call(
        mlp_kernel,
        out_shape=jax.ShapeDtypeStruct((n_output, B_pad), jnp.float32),
        grid_spec=pltpu.PrefetchScalarGridSpec(
            num_scalar_prefetch=0,
            grid=(n_steps,),
            in_specs=[
                # x: streamed per batch tile (double-buffered by Pallas).
                pl.BlockSpec((tb, n_input), lambda i: (i, 0)),
                # Weights/biases: constant index_map -> resident in VMEM.
                pl.BlockSpec((n_input, hidden_pad), lambda i: (0, 0)),
                pl.BlockSpec((1, hidden_pad), lambda i: (0, 0)),
                pl.BlockSpec((n_output, hidden_pad), lambda i: (0, 0)),
                pl.BlockSpec((n_output, 1), lambda i: (0, 0)),
            ],
            # Lane-dense transposed output tile: batch on the 128-lane axis.
            out_specs=pl.BlockSpec((n_output, tb), lambda i: (0, i)),
        ),
        compiler_params=pltpu.CompilerParams(
            dimension_semantics=("parallel",),   # independent tiles -> megacore
            vmem_limit_bytes=vmem_limit,
        ),
        cost_estimate=cost,
    )(x, w1_in, b1_row, w2_t, b2_col)

    return out_t[:, :B]


@functools.partial(jax.jit, static_argnames=("tile_b",))
def net_forward(x, w1_in, b1_row, w2_t, b2_col, *, tile_b=8192):
    """Module-contract forward: x [B, n_input] -> [B, n_output].

    Callers that can accept the transposed (n_output, B) layout should call
    net_forward_t directly and skip this final relayout.
    """
    return net_forward_t(x, w1_in, b1_row, w2_t, b2_col, tile_b=tile_b).T


def reference_forward(x, w1, b1, w2, b2):
    h = jnp.maximum(x @ w1.T + b1, 0.0)
    return h @ w2.T + b2


if __name__ == "__main__":
    # Shapes consistent with the module: Net(n_input=32, n_output=4), hidden=10.
    n_input, n_hidden, n_output = 32, 10, 4

    key = jax.random.PRNGKey(0)
    kx, kx2, kw1, kb1, kw2, kb2 = jax.random.split(key, 6)

    # Deterministic parameter init (uniform, roughly PyTorch-Linear-like scale).
    bound1 = 1.0 / (n_input ** 0.5)
    w1 = jax.random.uniform(kw1, (n_hidden, n_input), jnp.float32, -bound1, bound1)
    b1 = jax.random.uniform(kb1, (n_hidden,), jnp.float32, -bound1, bound1)
    bound2 = 1.0 / (n_hidden ** 0.5)
    w2 = jax.random.uniform(kw2, (n_output, n_hidden), jnp.float32, -bound2, bound2)
    b2 = jax.random.uniform(kb2, (n_output,), jnp.float32, -bound2, bound2)

    # One-time parameter prep (hidden 10 -> 128 zero-pad).  f32 keeps 1e-5 tol;
    # pass compute_dtype=jnp.bfloat16 only if x already arrives as bf16 in HBM.
    params = prepare_params(w1, b1, w2, b2, compute_dtype=jnp.float32)

    # Small batch (single grid step).
    x = jax.random.normal(kx, (8, n_input), dtype=jnp.float32)
    out = jax.block_until_ready(net_forward(x, *params))
    ref = reference_forward(x, w1, b1, w2, b2)
    assert out.shape == (8, n_output)
    assert jnp.allclose(out, ref, atol=1e-5, rtol=1e-5), "mismatch (small batch)"

    # Larger batch exercising a multi-step parallel grid + minimal tail padding.
    x2 = jax.random.normal(kx2, (1000, n_input), dtype=jnp.float32)
    out2 = jax.block_until_ready(net_forward(x2, *params, tile_b=256))
    ref2 = reference_forward(x2, w1, b1, w2, b2)
    assert out2.shape == (1000, n_output)
    assert jnp.allclose(out2, ref2, atol=1e-5, rtol=1e-5), "mismatch (large batch)"

    print("KERNEL_OK")
</pallas_src>

<mosaic_0001>
module attributes {stable_mosaic.version = 11 : i64} {
  func.func @mlp_kernel(%arg0: i32, %arg1: memref<8x32xf32, #tpu.memory_space<vmem>>, %arg2: memref<32x128xf32, #tpu.memory_space<vmem>>, %arg3: memref<1x128xf32, #tpu.memory_space<vmem>>, %arg4: memref<4x128xf32, #tpu.memory_space<vmem>>, %arg5: memref<4x1xf32, #tpu.memory_space<vmem>>, %arg6: memref<4x8xf32, #tpu.memory_space<vmem>>) attributes {dimension_semantics = [#tpu.dimension_semantics<parallel>], iteration_bounds = array<i64: 1>, scalar_prefetch = 0 : i64, scratch_operands = 0 : i64, tpu.core_type = #tpu.core_type<tc>, window_params = [{transform_indices = @transform_0, window_bounds = array<i64: 8, 32>}, {pipeline_mode = #tpu.pipeline_mode<synchronous>, transform_indices = @transform_1, window_bounds = array<i64: 32, 128>}, {pipeline_mode = #tpu.pipeline_mode<synchronous>, transform_indices = @transform_2, window_bounds = array<i64: 1, 128>}, {pipeline_mode = #tpu.pipeline_mode<synchronous>, transform_indices = @transform_3, window_bounds = array<i64: 4, 128>}, {pipeline_mode = #tpu.pipeline_mode<synchronous>, transform_indices = @transform_4, window_bounds = array<i64: 4, 1>}, {transform_indices = @transform_5, window_bounds = array<i64: 4, 8>}]} {
    %c0 = arith.constant 0 : index
    %c0_0 = arith.constant 0 : index
    %0 = vector.load %arg1[%c0, %c0_0] : memref<8x32xf32, #tpu.memory_space<vmem>>, vector<8x32xf32>
    %c0_1 = arith.constant 0 : index
    %c0_2 = arith.constant 0 : index
    %1 = vector.load %arg2[%c0_1, %c0_2] : memref<32x128xf32, #tpu.memory_space<vmem>>, vector<32x128xf32>
    %cst = arith.constant dense<0.000000e+00> : vector<8x128xf32>
    %2 = tpu.matmul %0, %1, %cst {dimension_numbers = #tpu.dot_dimension_numbers<[1], [0], [0], [1], [0, 0, 1, 1], [], []>} : vector<8x32xf32>, vector<32x128xf32>, vector<8x128xf32> -> vector<8x128xf32>
    %c0_3 = arith.constant 0 : index
    %c0_4 = arith.constant 0 : index
    %3 = vector.load %arg3[%c0_3, %c0_4] : memref<1x128xf32, #tpu.memory_space<vmem>>, vector<1x128xf32>
    %4 = vector.broadcast %3 : vector<1x128xf32> to vector<8x128xf32>
    %5 = arith.addf %2, %4 : vector<8x128xf32>
    %cst_5 = arith.constant 0.000000e+00 : f32
    %6 = vector.broadcast %cst_5 : f32 to vector<8x128xf32>
    %7 = arith.maximumf %5, %6 : vector<8x128xf32>
    %c0_6 = arith.constant 0 : index
    %c0_7 = arith.constant 0 : index
    %8 = vector.load %arg4[%c0_6, %c0_7] : memref<4x128xf32, #tpu.memory_space<vmem>>, vector<4x128xf32>
    %9 = tpu.transpose %7, [1, 0] : vector<8x128xf32> -> vector<128x8xf32>
    %cst_8 = arith.constant dense<0.000000e+00> : vector<4x8xf32>
    %10 = tpu.matmul %8, %9, %cst_8 {dimension_numbers = #tpu.dot_dimension_numbers<[1], [0], [0], [1], [0, 0, 1, 1], [], []>} : vector<4x128xf32>, vector<128x8xf32>, vector<4x8xf32> -> vector<4x8xf32>
    %c0_9 = arith.constant 0 : index
    %c0_10 = arith.constant 0 : index
    %11 = vector.load %arg5[%c0_9, %c0_10] : memref<4x1xf32, #tpu.memory_space<vmem>>, vector<4x1xf32>
    %12 = vector.broadcast %11 : vector<4x1xf32> to vector<4x8xf32>
    %13 = arith.addf %10, %12 : vector<4x8xf32>
    %c0_11 = arith.constant 0 : index
    %c0_12 = arith.constant 0 : index
    %14 = vector.load %arg6[%c0_11, %c0_12] : memref<4x8xf32, #tpu.memory_space<vmem>>, vector<4x8xf32>
    tpu.vector_store %arg6[%c0_11, %c0_12], %13 {strides = array<i32>} : memref<4x8xf32, #tpu.memory_space<vmem>>, vector<4x8xf32>,
    return
  }
  func.func @transform_0(%arg0: i32) -> (i32, i32) {
    %c0_i32 = arith.constant 0 : i32
    %c0_i32_0 = arith.constant 0 : i32
    return %arg0, %c0_i32 : i32, i32
  }
  func.func @transform_1(%arg0: i32) -> (i32, i32) {
    %c0_i32 = arith.constant 0 : i32
    %c0_i32_0 = arith.constant 0 : i32
    %c0_i32_1 = arith.constant 0 : i32
    return %c0_i32, %c0_i32_0 : i32, i32
  }
  func.func @transform_2(%arg0: i32) -> (i32, i32) {
    %c0_i32 = arith.constant 0 : i32
    %c0_i32_0 = arith.constant 0 : i32
    %c0_i32_1 = arith.constant 0 : i32
    return %c0_i32, %c0_i32_0 : i32, i32
  }
  func.func @transform_3(%arg0: i32) -> (i32, i32) {
    %c0_i32 = arith.constant 0 : i32
    %c0_i32_0 = arith.constant 0 : i32
    %c0_i32_1 = arith.constant 0 : i32
    return %c0_i32, %c0_i32_0 : i32, i32
  }
  func.func @transform_4(%arg0: i32) -> (i32, i32) {
    %c0_i32 = arith.constant 0 : i32
    %c0_i32_0 = arith.constant 0 : i32
    %c0_i32_1 = arith.constant 0 : i32
    return %c0_i32, %c0_i32_0 : i32, i32
  }
  func.func @transform_5(%arg0: i32) -> (i32, i32) {
    %c0_i32 = arith.constant 0 : i32
    %c0_i32_0 = arith.constant 0 : i32
    return %c0_i32, %arg0 : i32, i32
  }
}

</mosaic_0001>

<llo_original>
// kernel: net_forward_t.1
$region0: #{net_forward_t.1}
  #allocation0 [shape = 'u32[]', space=smem, size = 0x4, offset = 0x4, fixed_abs, tag = 'smem constant byte address 0x4 - core index']
  #allocation1 [shape = 'u32[144,128]{1,0:T(1,128)}', space=vmem, size = 0x12000, scoped, tag = 'internal scratch']
  %s0 = inlined_call_operand.hbm [shape: f32[8,32], index: 0, kind: input, shape index: {}]
  %s1 = inlined_call_operand.hbm [shape: f32[32,128], index: 1, kind: input, shape index: {}]
  %s2 = inlined_call_operand.vmem [shape: f32[1,128], index: 2, kind: input, shape index: {}]
  %s3 = inlined_call_operand.vmem [shape: f32[4,128], index: 3, kind: input, shape index: {}]
  %s4 = inlined_call_operand.vmem [shape: f32[4,1], index: 4, kind: input, shape index: {}]
  %s5 = inlined_call_operand.hbm [shape: f32[4,8], index: 5, kind: output, shape index: {}]
  %s6 = sld [smem:[#allocation0]]
  $region38: #{net_forward_t.1} parent=0
    _
  %s8 = ssub.s32 1, %s6
  %s9 = scalar_select 0, %s8, %s6
  $region1: #{net_forward_t.1} parent=0
    #allocation2 [shape = 'u8[4096]{0}', space=vmem, size = 0x1000, scoped, tag = 'input window, operand 0, single buffered']
    #allocation3 [shape = 's32[1]{0}', space=sflag, size = 0x4, scoped, tag = 'scoped memory for net_forward_t.1']
    #allocation4 [shape = 's32[1]{0}', space=sflag, size = 0x4, scoped, tag = 'scoped memory for net_forward_t.1']
    #allocation5 [shape = 'u8[16384]{0}', space=vmem, size = 0x4000, scoped, tag = 'input window, operand 1, single buffered']
    #allocation6 [shape = 's32[1]{0}', space=sflag, size = 0x4, scoped, tag = 'scoped memory for net_forward_t.1']
    #allocation7 [shape = 'u8[2048]{0}', space=vmem, size = 0x800, scoped, tag = 'output window, operand 0, single buffered']
    %10 = vsyncpa [#allocation3], 0
    %11 = vsyncpa [#allocation6], 0
    %12 = vsyncpa [#allocation4], 0
    // Predicated region
    $region2: #{net_forward_t.1} parent=1 // pred_check
      _
    $region3: #{net_forward_t.1} parent=1 // pred_check_branch
      %14 = sbr.rel (0) target = $region5
    $region4: #{net_forward_t.1} parent=1 // pred_region
      %s16 = ssub.s32 128, 128
      %17 = vsyncadd [#allocation3], %s16
      %s19 = sshll.u32 [#allocation2], 4
      %s20 = int_to_ptr.vmem [resolvable:$true] %s19
      %22 = dma.hbm_to_vmem [thread:$0]  %s0, 128, %s20, [#allocation3]
    $region5: #{net_forward_t.1} parent=1 // pred_fallthru
      _
    // Predicated region
    $region6: #{net_forward_t.1} parent=1 // pred_check
      _
    $region7: #{net_forward_t.1} parent=1 // pred_check_branch
      %24 = sbr.rel (0) target = $region9
    $region8: #{net_forward_t.1} parent=1 // pred_region
      %s26 = ssub.s32 512, 512
      %27 = vsyncadd [#allocation6], %s26
      %s28 = sshll.u32 [#allocation5], 4
      %s29 = int_to_ptr.vmem [resolvable:$true] %s28
      %34 = dma.hbm_to_vmem [thread:$0]  %s1, 512, %s29, [#allocation6], 128, 128, 8
    $region9: #{net_forward_t.1} parent=1 // pred_fallthru
      _
    // Predicated region
    $region10: #{net_forward_t.1} parent=1 // pred_check
      _
    $region11: #{net_forward_t.1} parent=1 // pred_check_branch
      %36 = sbr.rel (0) target = $region13
    $region12: #{net_forward_t.1} parent=1 // pred_region
      _
    $region13: #{net_forward_t.1} parent=1 // pred_fallthru
      _
    // Predicated region
    $region14: #{net_forward_t.1} parent=1 // pred_check
      _
    $region15: #{net_forward_t.1} parent=1 // pred_check_branch
      %38 = sbr.rel (0) target = $region17
    $region16: #{net_forward_t.1} parent=1 // pred_region
      _
    $region17: #{net_forward_t.1} parent=1 // pred_fallthru
      _
    // Predicated region
    $region18: #{net_forward_t.1} parent=1 // pred_check
      _
    $region19: #{net_forward_t.1} parent=1 // pred_check_branch
      %40 = sbr.rel (0) target = $region21
    $region20: #{net_forward_t.1} parent=1 // pred_region
      _
    $region21: #{net_forward_t.1} parent=1 // pred_fallthru
      _
    // Predicated region
    $region22: #{net_forward_t.1} parent=1 // pred_check
      _
    $region23: #{net_forward_t.1} parent=1 // pred_check_branch
      %42 = sbr.rel (0) target = $region25
    $region24: #{net_forward_t.1} parent=1 // pred_region
      %43 = dma.done [#allocation3], 128
    $region25: #{net_forward_t.1} parent=1 // pred_fallthru
      _
    // Predicated region
    $region26: #{net_forward_t.1} parent=1 // pred_check
      _
    $region27: #{net_forward_t.1} parent=1 // pred_check_branch
      %45 = sbr.rel (0) target = $region29
    $region28: #{net_forward_t.1} parent=1 // pred_region
      %46 = dma.done [#allocation6], 512
    $region29: #{net_forward_t.1} parent=1 // pred_fallthru
      _
    %v47 = vld [vmem:[#allocation2] sm:$0xff]
    %v48 = vld [vmem:[#allocation5] sm:$0xff]
    %v49 = vld [vmem:[#allocation5 + $0x8] sm:$0xff]
    %v50 = vld [vmem:[#allocation5 + $0x10] sm:$0xff]
    %v51 = vld [vmem:[#allocation5 + $0x18] sm:$0xff]
    %v52 = vld [vmem:[%s2] sm:$0x1]
    %v54 = vlaneseq
    %v55 = vshrl.u32 %v54, 7
    %v56 = vsub.s32 0, %v55
    %v57 = vrot.slane %v52, %v56
    %vm59 = vcmask 261120
    %v61 = vsel %vm59, %v47, 0
    %63 = vmatprep.subr.mxu0 0.0
    %64 = vmatpush1.msra.mxu0 %v48
    %65 = vmatprep.subr.mxu0 0.0
    %66 = vmatpush1.msra.mxu0 %v49
    %67 = vmatprep.subr.mxu0 0.0
    %68 = vmatpush1.msra.mxu0 %v50
    %69 = vmatprep.subr.mxu0 0.0
    %70 = vmatpush1.msra.mxu0 %v51
    %71 = vmatprep.subr.mxu0 0.0
    %72 = vmatpush1.msra.mxu0 0.0
    %73 = vmatprep.subr.mxu0 0.0
    %74 = vmatpush1.msra.mxu0 0.0
    %75 = vmatprep.subr.mxu0 0.0
    %76 = vmatpush1.msra.mxu0 0.0
    %77 = vmatprep.subr.mxu0 0.0
    %78 = vmatpush1.msra.mxu0 0.0
    %79 = vmatprep.subr.mxu0 0.0
    %80 = vmatpush1.msra.mxu0 0.0
    %81 = vmatprep.subr.mxu0 0.0
    %82 = vmatpush1.msra.mxu0 0.0
    %83 = vmatprep.subr.mxu0 0.0
    %84 = vmatpush1.msra.mxu0 0.0
    %85 = vmatprep.subr.mxu0 0.0
    %86 = vmatpush1.msra.mxu0 0.0
    %87 = vmatprep.subr.mxu0 0.0
    %88 = vmatpush1.msra.mxu0 0.0
    %89 = vmatprep.subr.mxu0 0.0
    %90 = vmatpush1.msra.mxu0 0.0
    %91 = vmatprep.subr.mxu0 0.0
    %92 = vmatpush1.msra.mxu0 0.0
    %93 = vmatprep.subr.mxu0 0.0
    %94 = vmatpush1.msra.mxu0 0.0
    %95 = vmatprep.subr.mxu0 0.0
    %96 = vmatpush1.msra.mxu0 0.0
    %97 = vmatprep.subr.mxu0 0.0
    %98 = vmatpush1.msra.mxu0 0.0
    %99 = vmatprep.subr.mxu0 0.0
    %100 = vmatpush1.msra.mxu0 0.0
    %101 = vmatprep.subr.mxu0 0.0
    %102 = vmatpush1.msra.mxu0 0.0
    %103 = vmatprep.subr.mxu0 0.0
    %104 = vmatpush1.msra.mxu0 0.0
    %105 = vmatprep.subr.mxu0 0.0
    %106 = vmatpush1.msra.mxu0 0.0
    %107 = vmatprep.subr.mxu0 0.0
    %108 = vmatpush1.msra.mxu0 0.0
    %109 = vmatprep.subr.mxu0 0.0
    %110 = vmatpush1.msra.mxu0 0.0
    %111 = vmatprep.subr.mxu0 0.0
    %112 = vmatpush1.msra.mxu0 0.0
    %113 = vmatprep.subr.mxu0 0.0
    %114 = vmatpush1.msra.mxu0 0.0
    %115 = vmatprep.subr.mxu0 0.0
    %116 = vmatpush1.msra.mxu0 0.0
    %117 = vmatprep.subr.mxu0 0.0
    %118 = vmatpush1.msra.mxu0 0.0
    %119 = vmatprep.subr.mxu0 0.0
    %120 = vmatpush1.msra.mxu0 0.0
    %121 = vmatprep.subr.mxu0 0.0
    %122 = vmatpush1.msra.mxu0 0.0
    %123 = vmatprep.subr.mxu0 0.0
    %124 = vmatpush1.msra.mxu0 0.0
    %125 = vmatprep.subr.mxu0 0.0
    %126 = vmatpush1.msra.mxu0 0.0
    %127 = vmatprep.mubr.f32.mxu0 0.0
    %128 = vmatmul.mubr.f32.gmra.mrb[0].mxu0 %v61
    %v129 = vpop.f32.mrb[0].mxu0
    %v130 = vadd.f32 %v57, %v129
    %v131 = vpop.f32.mrb[0].mxu0
    %132 = vdwg.mxu0
    %v133 = vmax.f32 %v130, 0.0
    %v134 = vld [vmem:[%s3] sm:$0xf]
    %v135 = vld [vmem:[%s4] sm:$0xf]
    %137 = vset.pattern.permute.xlu0 0
    %138 = vperm.xlu0 %137, %v135
    %v139 = vpop.permute.xlu0 %138
    %141 = vmatprep.subr.mxu0 0.0
    %142 = vmatpush1.xpose.msra.mxu0 %v133
    %143 = vmatprep.subr.mxu0 0.0
    %144 = vmatpush1.xpose.msra.mxu0 0.0
    %145 = vmatprep.subr.mxu0 0.0
    %146 = vmatpush1.xpose.msra.mxu0 0.0
    %147 = vmatprep.subr.mxu0 0.0
    %148 = vmatpush1.xpose.msra.mxu0 0.0
    %149 = vmatprep.subr.mxu0 0.0
    %150 = vmatpush1.xpose.msra.mxu0 0.0
    %151 = vmatprep.subr.mxu0 0.0
    %152 = vmatpush1.xpose.msra.mxu0 0.0
    %153 = vmatprep.subr.mxu0 0.0
    %154 = vmatpush1.xpose.msra.mxu0 0.0
    %155 = vmatprep.subr.mxu0 0.0
    %156 = vmatpush1.xpose.msra.mxu0 0.0
    %157 = vmatprep.subr.mxu0 0.0
    %158 = vmatpush1.xpose.msra.mxu0 0.0
    %159 = vmatprep.subr.mxu0 0.0
    %160 = vmatpush1.xpose.msra.mxu0 0.0
    %161 = vmatprep.subr.mxu0 0.0
    %162 = vmatpush1.xpose.msra.mxu0 0.0
    %163 = vmatprep.subr.mxu0 0.0
    %164 = vmatpush1.xpose.msra.mxu0 0.0
    %165 = vmatprep.subr.mxu0 0.0
    %166 = vmatpush1.xpose.msra.mxu0 0.0
    %167 = vmatprep.subr.mxu0 0.0
    %168 = vmatpush1.xpose.msra.mxu0 0.0
    %169 = vmatprep.subr.mxu0 0.0
    %170 = vmatpush1.xpose.msra.mxu0 0.0
    %171 = vmatprep.subr.mxu0 0.0
    %172 = vmatpush1.xpose.msra.mxu0 0.0
    %173 = vmatprep.subr.mxu0 0.0
    %174 = vmatpush1.xpose.msra.mxu0 0.0
    %175 = vmatprep.subr.mxu0 0.0
    %176 = vmatpush1.xpose.msra.mxu0 0.0
    %177 = vmatprep.subr.mxu0 0.0
    %178 = vmatpush1.xpose.msra.mxu0 0.0
    %179 = vmatprep.subr.mxu0 0.0
    %180 = vmatpush1.xpose.msra.mxu0 0.0
    %181 = vmatprep.subr.mxu0 0.0
    %182 = vmatpush1.xpose.msra.mxu0 0.0
    %183 = vmatprep.subr.mxu0 0.0
    %184 = vmatpush1.xpose.msra.mxu0 0.0
    %185 = vmatprep.subr.mxu0 0.0
    %186 = vmatpush1.xpose.msra.mxu0 0.0
    %187 = vmatprep.subr.mxu0 0.0
    %188 = vmatpush1.xpose.msra.mxu0 0.0
    %189 = vmatprep.subr.mxu0 0.0
    %190 = vmatpush1.xpose.msra.mxu0 0.0
    %191 = vmatprep.subr.mxu0 0.0
    %192 = vmatpush1.xpose.msra.mxu0 0.0
    %193 = vmatprep.subr.mxu0 0.0
    %194 = vmatpush1.xpose.msra.mxu0 0.0
    %195 = vmatprep.subr.mxu0 0.0
    %196 = vmatpush1.xpose.msra.mxu0 0.0
    %197 = vmatprep.subr.mxu0 0.0
    %198 = vmatpush1.xpose.msra.mxu0 0.0
    %199 = vmatprep.subr.mxu0 0.0
    %200 = vmatpush1.xpose.msra.mxu0 0.0
    %201 = vmatprep.subr.mxu0 0.0
    %202 = vmatpush1.xpose.msra.mxu0 0.0
    %203 = vmatprep.subr.mxu0 0.0
    %204 = vmatpush1.xpose.msra.mxu0 0.0
    %205 = vmatprep.mubr.f32.mxu0 0.0
    %206 = vmatmul.mubr.f32.gmra.mrb[0].mxu0 %v134
    %v207 = vpop.f32.mrb[0].mxu0
    %v208 = vadd.f32 %v139, %v207
    %v209 = vpop.f32.mrb[0].mxu0
    %210 = vdwg.mxu0
    %vm211 = vcmask 60416
    %212 = vst.msk [vmem:[#allocation7] sm:$0xf] %vm211, %v208
    // Predicated region
    $region30: #{net_forward_t.1} parent=1 // pred_check
      _
    $region31: #{net_forward_t.1} parent=1 // pred_check_branch
      %214 = sbr.rel (0) target = $region33
    $region32: #{net_forward_t.1} parent=1 // pred_region
      %s216 = ssub.s32 64, 64
      %217 = vsyncadd [#allocation4], %s216
      %s219 = sshll.u32 [#allocation7], 4
      %s220 = int_to_ptr.vmem [resolvable:$true] %s219
      %222 = dma.vmem_to_hbm [thread:$0]  %s220, 64, %s5, [#allocation4]
    $region33: #{net_forward_t.1} parent=1 // pred_fallthru
      _
    // Predicated region
    $region34: #{net_forward_t.1} parent=1 // pred_check
      _
    $region35: #{net_forward_t.1} parent=1 // pred_check_branch
      %224 = sbr.rel (0) target = $region37
    $region36: #{net_forward_t.1} parent=1 // pred_region
      %225 = dma.done [#allocation4], 64
    $region37: #{net_forward_t.1} parent=1 // pred_fallthru
      _
    %226 = vsyncpa [#allocation3], 1
    %227 = vsyncpa [#allocation6], 1
    %228 = vsyncpa [#allocation4], 1

</llo_original>
